<compile_context>
chip_gen: v5e
topology: v5e:2x2
jax: 0.10.0
libtpu: 0.0.40
codegen_flags: <defaults>
</compile_context>

<pallas_src>
import jax
import jax.numpy as jnp
from jax import lax
from jax.experimental import pallas as pl
from jax.experimental.pallas import tpu as pltpu


def _mlp_kernel(x_ref, w1t_ref, b1_ref, w2t_ref, b2_ref, w3_ref, b3_ref, o_ref):
    """One batch tile of the MLP, everything lane-dense (batch on lane axis)."""
    cdt = w1t_ref.dtype                      # MXU compute dtype (bf16 default)

    x = x_ref[...]                           # (tile, D), natural layout
    if x.dtype != cdt:
        x = x.astype(cdt)

    # Layer 1: (H1, D) contracted with (tile, D) over D -> (H1, tile).
    # Same A@B^T dimension numbers as flash-attention's q@k^T, so Mosaic does
    # not materialize an XLU transpose of the big x tile.
    h1 = lax.dot_general(
        w1t_ref[...], x,
        dimension_numbers=(((1,), (1,)), ((), ())),
        preferred_element_type=jnp.float32,
    )
    h1 = jnp.maximum(h1 + b1_ref[...], 0.0)          # (H1, tile), full vregs

    # Layer 2: (H2, H1) @ (H1, tile) -> (H2, tile)
    h2 = jnp.dot(w2t_ref[...], h1.astype(cdt), preferred_element_type=jnp.float32)
    h2 = jnp.maximum(h2 + b2_ref[...], 0.0)          # (H2, tile)

    # Layer 3: (1, H2) @ (H2, tile) -> (1, tile); unmasked lane-dense store.
    logits = jnp.dot(w3_ref[...], h2.astype(cdt), preferred_element_type=jnp.float32)
    o_ref[...] = jax.nn.sigmoid(logits + b3_ref[...]).astype(o_ref.dtype)


def _detect_num_tensorcores():
    """Best-effort TensorCores-per-chip (2 on v7x, 1 on v5e/v6e); safe default 1."""
    try:
        info = pltpu.get_tpu_info()
    except Exception:
        return 1
    for attr in ("num_cores", "core_count", "tensorcores_per_chip", "num_tensorcores"):
        val = getattr(info, attr, None)
        if val:
            try:
                return max(1, min(int(val), 2))
            except (TypeError, ValueError):
                continue
    return 1


def _round_up(value, multiple):
    return ((value + multiple - 1) // multiple) * multiple


def _select_tile(batch, batch_tile, num_cores):
    tile = max(1, min(int(batch_tile), batch))
    if num_cores > 1:
        # Only split the batch across grid steps when the chip actually has
        # multiple TensorCores (v7x megacore); on v5e/v6e the grid is serial.
        tile = max(1, min(tile, pl.cdiv(batch, num_cores)))
    # Lane-dense output: a multiple of 128 keeps the (1, tile) stores unmasked
    # and the batch-on-lane matmul N aligned; 16 (tiny B fallback) still
    # satisfies bf16 sublane packing for the x block.
    return _round_up(tile, 128 if tile >= 128 else 16)


def precond_predictor_forward(x, params, *, batch_tile=1024,
                              compute_dtype=jnp.bfloat16, num_cores=None):
    """Forward pass of Precond_Predictor as a single Pallas TPU kernel.

    x: [B, D] float32 or bfloat16, D = 3*(16+2) + action_param_size.
       (Feed bf16 x to halve the dominant HBM read on the bf16 compute path.)
    params: dict with w1 [D,32], b1 [1,32], w2 [32,16], b2 [1,16],
            w3 [16,1], b3 [1,1]  (weights stored [in_features, out_features]).
    returns: [B, 1] float32 probabilities.
    """
    B, D = x.shape

    if num_cores is None:
        num_cores = _detect_num_tensorcores()

    # Pre-transpose weights to (out_features, in_features) so every layer's
    # activations carry the batch on the lane axis.  Biases become columns.
    w1t = jnp.asarray(params["w1"]).T.astype(compute_dtype)              # (H1, D)
    b1 = jnp.asarray(params["b1"]).reshape(-1, 1).astype(jnp.float32)    # (H1, 1)
    w2t = jnp.asarray(params["w2"]).T.astype(compute_dtype)              # (H2, H1)
    b2 = jnp.asarray(params["b2"]).reshape(-1, 1).astype(jnp.float32)    # (H2, 1)
    w3r = jnp.asarray(params["w3"]).T.astype(compute_dtype)              # (1, H2)
    b3 = jnp.asarray(params["b3"]).reshape(1, 1).astype(jnp.float32)     # (1, 1)
    H1 = w1t.shape[0]
    H2 = w2t.shape[0]

    tile = _select_tile(B, batch_tile, num_cores)
    num_tiles = pl.cdiv(B, tile)

    out_rows = pl.pallas_call(
        _mlp_kernel,
        out_shape=jax.ShapeDtypeStruct((num_tiles, tile), jnp.float32),
        grid_spec=pltpu.PrefetchScalarGridSpec(
            num_scalar_prefetch=0,
            grid=(num_tiles,),
            in_specs=[
                pl.BlockSpec((tile, D), lambda i: (i, 0)),   # x tile (batch rows)
                pl.BlockSpec((H1, D), lambda i: (0, 0)),     # w1^T (VMEM-resident)
                pl.BlockSpec((H1, 1), lambda i: (0, 0)),     # b1 column
                pl.BlockSpec((H2, H1), lambda i: (0, 0)),    # w2^T
                pl.BlockSpec((H2, 1), lambda i: (0, 0)),     # b2 column
                pl.BlockSpec((1, H2), lambda i: (0, 0)),     # w3 row
                pl.BlockSpec((1, 1), lambda i: (0, 0)),      # b3
            ],
            out_specs=pl.BlockSpec((1, tile), lambda i: (i, 0)),  # lane-dense row
        ),
        compiler_params=pltpu.CompilerParams(
            dimension_semantics=("parallel",),
        ),
    )(x, w1t, b1, w2t, b2, w3r, b3)

    # (num_tiles, tile) -> (B, 1); lanes beyond B came from the (partially
    # out-of-bounds) last batch block and are discarded here.
    return out_rows.reshape(num_tiles * tile, 1)[:B]


def init_params(key, action_param_size):
    """PyTorch nn.Linear-style init: U(-1/sqrt(fan_in), 1/sqrt(fan_in)).

    Weights stored as [in_features, out_features] (transposed vs torch storage).
    """
    in_dim = 3 * (16 + 2) + action_param_size
    dims = [(in_dim, 32), (32, 16), (16, 1)]
    params = {}
    for idx, (fan_in, fan_out) in enumerate(dims, start=1):
        key, kw, kb = jax.random.split(key, 3)
        bound = 1.0 / jnp.sqrt(jnp.float32(fan_in))
        params[f"w{idx}"] = jax.random.uniform(
            kw, (fan_in, fan_out), jnp.float32, minval=-bound, maxval=bound
        )
        params[f"b{idx}"] = jax.random.uniform(
            kb, (1, fan_out), jnp.float32, minval=-bound, maxval=bound
        )
    return params


def reference_forward(x, params):
    h1 = jnp.maximum(x @ params["w1"] + params["b1"], 0.0)
    h2 = jnp.maximum(h1 @ params["w2"] + params["b2"], 0.0)
    return jax.nn.sigmoid(h2 @ params["w3"] + params["b3"])


if __name__ == "__main__":
    ACTION_PARAM_SIZE = 10                 # -> input dim = 3*(16+2) + 10 = 64
    IN_DIM = 3 * (16 + 2) + ACTION_PARAM_SIZE

    key = jax.random.PRNGKey(0)
    key, kx = jax.random.split(key)
    params = init_params(key, ACTION_PARAM_SIZE)

    # Case 1: small ragged batch (B=60), exact f32 compute path, single tile.
    x = jax.random.normal(kx, (60, IN_DIM), jnp.float32)
    ref = reference_forward(x, params)
    out_f32 = jax.block_until_ready(
        precond_predictor_forward(x, params, compute_dtype=jnp.float32))
    assert out_f32.shape == (60, 1)
    assert jnp.allclose(out_f32, ref, atol=1e-4, rtol=1e-4), "f32 mismatch vs reference"

    # Case 2: same batch, default bf16 MXU path (f32 accumulation / epilogue).
    out_bf16 = jax.block_until_ready(precond_predictor_forward(x, params))
    assert out_bf16.shape == (60, 1)
    assert jnp.allclose(out_bf16, ref, atol=2e-2, rtol=2e-2), "bf16 mismatch vs reference"

    # Case 2b: bf16 x fed straight to the kernel (no in-kernel cast, half DMA).
    out_bf16x = jax.block_until_ready(
        precond_predictor_forward(x.astype(jnp.bfloat16), params))
    assert jnp.allclose(out_bf16x, ref, atol=3e-2, rtol=3e-2), "bf16-x mismatch vs reference"

    # Case 3: multi-tile ragged grid (B=300, 128-row tiles -> 3 grid steps,
    # last block partially out-of-bounds) with a forced 2-core (v7x-style) split.
    key, kx2 = jax.random.split(key)
    x2 = jax.random.normal(kx2, (300, IN_DIM), jnp.float32)
    ref2 = reference_forward(x2, params)
    out2 = jax.block_until_ready(
        precond_predictor_forward(x2, params, batch_tile=128,
                                  compute_dtype=jnp.float32, num_cores=2))
    assert out2.shape == (300, 1)
    assert jnp.allclose(out2, ref2, atol=1e-4, rtol=1e-4), "multi-tile mismatch vs reference"

    print("KERNEL_OK")
</pallas_src>

<mosaic_0001>
module attributes {stable_mosaic.version = 11 : i64} {
  func.func @_mlp_kernel(%arg0: i32, %arg1: memref<64x64xf32, #tpu.memory_space<vmem>>, %arg2: memref<32x64xf32, #tpu.memory_space<vmem>>, %arg3: memref<32x1xf32, #tpu.memory_space<vmem>>, %arg4: memref<16x32xf32, #tpu.memory_space<vmem>>, %arg5: memref<16x1xf32, #tpu.memory_space<vmem>>, %arg6: memref<1x16xf32, #tpu.memory_space<vmem>>, %arg7: memref<1x1xf32, #tpu.memory_space<vmem>>, %arg8: memref<1x64xf32, #tpu.memory_space<vmem>>) attributes {dimension_semantics = [#tpu.dimension_semantics<parallel>], iteration_bounds = array<i64: 1>, scalar_prefetch = 0 : i64, scratch_operands = 0 : i64, tpu.core_type = #tpu.core_type<tc>, window_params = [{transform_indices = @transform_0, window_bounds = array<i64: 64, 64>}, {pipeline_mode = #tpu.pipeline_mode<synchronous>, transform_indices = @transform_1, window_bounds = array<i64: 32, 64>}, {pipeline_mode = #tpu.pipeline_mode<synchronous>, transform_indices = @transform_2, window_bounds = array<i64: 32, 1>}, {pipeline_mode = #tpu.pipeline_mode<synchronous>, transform_indices = @transform_3, window_bounds = array<i64: 16, 32>}, {pipeline_mode = #tpu.pipeline_mode<synchronous>, transform_indices = @transform_4, window_bounds = array<i64: 16, 1>}, {pipeline_mode = #tpu.pipeline_mode<synchronous>, transform_indices = @transform_5, window_bounds = array<i64: 1, 16>}, {pipeline_mode = #tpu.pipeline_mode<synchronous>, transform_indices = @transform_6, window_bounds = array<i64: 1, 1>}, {transform_indices = @transform_7, window_bounds = array<i64: 1, 64>}]} {
    %c0 = arith.constant 0 : index
    %c0_0 = arith.constant 0 : index
    %0 = vector.load %arg1[%c0, %c0_0] : memref<64x64xf32, #tpu.memory_space<vmem>>, vector<64x64xf32>
    %c0_1 = arith.constant 0 : index
    %c0_2 = arith.constant 0 : index
    %1 = vector.load %arg2[%c0_1, %c0_2] : memref<32x64xf32, #tpu.memory_space<vmem>>, vector<32x64xf32>
    %cst = arith.constant dense<0.000000e+00> : vector<32x64xf32>
    %2 = tpu.matmul %1, %0, %cst {dimension_numbers = #tpu.dot_dimension_numbers<[1], [1], [0], [0], [0, 0, 1, 0], [], []>} : vector<32x64xf32>, vector<64x64xf32>, vector<32x64xf32> -> vector<32x64xf32>
    %c0_3 = arith.constant 0 : index
    %c0_4 = arith.constant 0 : index
    %3 = vector.load %arg3[%c0_3, %c0_4] : memref<32x1xf32, #tpu.memory_space<vmem>>, vector<32x1xf32>
    %4 = vector.broadcast %3 : vector<32x1xf32> to vector<32x64xf32>
    %5 = arith.addf %2, %4 : vector<32x64xf32>
    %cst_5 = arith.constant 0.000000e+00 : f32
    %6 = vector.broadcast %cst_5 : f32 to vector<32x64xf32>
    %7 = arith.maximumf %5, %6 : vector<32x64xf32>
    %c0_6 = arith.constant 0 : index
    %c0_7 = arith.constant 0 : index
    %8 = vector.load %arg4[%c0_6, %c0_7] : memref<16x32xf32, #tpu.memory_space<vmem>>, vector<16x32xf32>
    %cst_8 = arith.constant dense<0.000000e+00> : vector<16x64xf32>
    %9 = tpu.matmul %8, %7, %cst_8 {dimension_numbers = #tpu.dot_dimension_numbers<[1], [0], [0], [1], [0, 0, 1, 1], [], []>} : vector<16x32xf32>, vector<32x64xf32>, vector<16x64xf32> -> vector<16x64xf32>
    %c0_9 = arith.constant 0 : index
    %c0_10 = arith.constant 0 : index
    %10 = vector.load %arg5[%c0_9, %c0_10] : memref<16x1xf32, #tpu.memory_space<vmem>>, vector<16x1xf32>
    %11 = vector.broadcast %10 : vector<16x1xf32> to vector<16x64xf32>
    %12 = arith.addf %9, %11 : vector<16x64xf32>
    %cst_11 = arith.constant 0.000000e+00 : f32
    %13 = vector.broadcast %cst_11 : f32 to vector<16x64xf32>
    %14 = arith.maximumf %12, %13 : vector<16x64xf32>
    %c0_12 = arith.constant 0 : index
    %c0_13 = arith.constant 0 : index
    %15 = vector.load %arg6[%c0_12, %c0_13] : memref<1x16xf32, #tpu.memory_space<vmem>>, vector<1x16xf32>
    %cst_14 = arith.constant dense<0.000000e+00> : vector<1x64xf32>
    %16 = tpu.matmul %15, %14, %cst_14 {dimension_numbers = #tpu.dot_dimension_numbers<[1], [0], [0], [1], [0, 0, 1, 1], [], []>} : vector<1x16xf32>, vector<16x64xf32>, vector<1x64xf32> -> vector<1x64xf32>
    %c0_15 = arith.constant 0 : index
    %c0_16 = arith.constant 0 : index
    %17 = vector.load %arg7[%c0_15, %c0_16] : memref<1x1xf32, #tpu.memory_space<vmem>>, vector<1x1xf32>
    %18 = vector.broadcast %17 : vector<1x1xf32> to vector<1x64xf32>
    %19 = arith.addf %16, %18 : vector<1x64xf32>
    %20 = arith.negf %19 : vector<1x64xf32>
    %21 = math.exp %20 : vector<1x64xf32>
    %cst_17 = arith.constant 1.000000e+00 : f32
    %22 = vector.broadcast %cst_17 : f32 to vector<1x64xf32>
    %23 = arith.addf %22, %21 : vector<1x64xf32>
    %24 = arith.divf %22, %23 : vector<1x64xf32>
    %c0_18 = arith.constant 0 : index
    %c0_19 = arith.constant 0 : index
    %25 = vector.load %arg8[%c0_18, %c0_19] : memref<1x64xf32, #tpu.memory_space<vmem>>, vector<1x64xf32>
    tpu.vector_store %arg8[%c0_18, %c0_19], %24 {strides = array<i32>} : memref<1x64xf32, #tpu.memory_space<vmem>>, vector<1x64xf32>,
    return
  }
  func.func @transform_0(%arg0: i32) -> (i32, i32) {
    %c0_i32 = arith.constant 0 : i32
    %c0_i32_0 = arith.constant 0 : i32
    return %arg0, %c0_i32 : i32, i32
  }
  func.func @transform_1(%arg0: i32) -> (i32, i32) {
    %c0_i32 = arith.constant 0 : i32
    %c0_i32_0 = arith.constant 0 : i32
    %c0_i32_1 = arith.constant 0 : i32
    return %c0_i32, %c0_i32_0 : i32, i32
  }
  func.func @transform_2(%arg0: i32) -> (i32, i32) {
    %c0_i32 = arith.constant 0 : i32
    %c0_i32_0 = arith.constant 0 : i32
    %c0_i32_1 = arith.constant 0 : i32
    return %c0_i32, %c0_i32_0 : i32, i32
  }
  func.func @transform_3(%arg0: i32) -> (i32, i32) {
    %c0_i32 = arith.constant 0 : i32
    %c0_i32_0 = arith.constant 0 : i32
    %c0_i32_1 = arith.constant 0 : i32
    return %c0_i32, %c0_i32_0 : i32, i32
  }
  func.func @transform_4(%arg0: i32) -> (i32, i32) {
    %c0_i32 = arith.constant 0 : i32
    %c0_i32_0 = arith.constant 0 : i32
    %c0_i32_1 = arith.constant 0 : i32
    return %c0_i32, %c0_i32_0 : i32, i32
  }
  func.func @transform_5(%arg0: i32) -> (i32, i32) {
    %c0_i32 = arith.constant 0 : i32
    %c0_i32_0 = arith.constant 0 : i32
    %c0_i32_1 = arith.constant 0 : i32
    return %c0_i32, %c0_i32_0 : i32, i32
  }
  func.func @transform_6(%arg0: i32) -> (i32, i32) {
    %c0_i32 = arith.constant 0 : i32
    %c0_i32_0 = arith.constant 0 : i32
    %c0_i32_1 = arith.constant 0 : i32
    return %c0_i32, %c0_i32_0 : i32, i32
  }
  func.func @transform_7(%arg0: i32) -> (i32, i32) {
    %c0_i32 = arith.constant 0 : i32
    %c0_i32_0 = arith.constant 0 : i32
    return %arg0, %c0_i32 : i32, i32
  }
}

</mosaic_0001>

<llo_original>
// kernel: tpu_custom_call.1
$region0: #{tpu_custom_call.1}
  #allocation0 [shape = 'u32[]', space=smem, size = 0x4, offset = 0x4, fixed_abs, tag = 'smem constant byte address 0x4 - core index']
  #allocation1 [shape = 'u32[72,128]{1,0:T(1,128)}', space=vmem, size = 0x9000, scoped, tag = 'internal scratch']
  #allocation2 [shape = 'f32[1,1]{1,0:T(1,128)S(1)}', space=vmem, size = 0x200, scoped, tag = 'scoped memory for tpu_custom_call.1']
  %s0 = inlined_call_operand.hbm [shape: f32[60,64], index: 0, kind: input, shape index: {}]
  %s1 = inlined_call_operand.vmem [shape: f32[32,64], index: 1, kind: input, shape index: {}]
  %s2 = inlined_call_operand.vmem [shape: f32[32,1], index: 2, kind: input, shape index: {}]
  %s3 = inlined_call_operand.vmem [shape: f32[16,32], index: 3, kind: input, shape index: {}]
  %s4 = inlined_call_operand.vmem [shape: f32[16,1], index: 4, kind: input, shape index: {}]
  %s5 = inlined_call_operand.vmem [shape: f32[1,16], index: 5, kind: input, shape index: {}]
  %s6 = inlined_call_operand.<no memory space> [shape: f32[1,1], index: 6, kind: input, shape index: {}]
  %s7 = inlined_call_operand.hbm [shape: f32[1,64], index: 7, kind: output, shape index: {}]
  %s8 = sld [smem:[#allocation0]]
  $region42: #{tpu_custom_call.1} parent=0
    _
  %s10 = ssub.s32 1, %s8
  %s11 = scalar_select 0, %s10, %s8
  %v12 = vstv %s6
  %13 = vst [vmem:[#allocation2] sm:$0x1] %v12
  $region1: #{tpu_custom_call.1} parent=0
    #allocation3 [shape = 'u8[32768]{0}', space=vmem, size = 0x8000, scoped, tag = 'input window, operand 0, single buffered']
    #allocation4 [shape = 's32[1]{0}', space=sflag, size = 0x4, scoped, tag = 'scoped memory for tpu_custom_call.1']
    #allocation5 [shape = 's32[1]{0}', space=sflag, size = 0x4, scoped, tag = 'scoped memory for tpu_custom_call.1']
    #allocation6 [shape = 'u8[512]{0}', space=vmem, size = 0x400, scoped, tag = 'output window, operand 0, single buffered']
    %14 = vsyncpa [#allocation4], 0
    %15 = vsyncpa [#allocation5], 0
    // Predicated region
    $region2: #{tpu_custom_call.1} parent=1 // pred_check
      _
    $region3: #{tpu_custom_call.1} parent=1 // pred_check_branch
      %17 = sbr.rel (0) target = $region5
    $region4: #{tpu_custom_call.1} parent=1 // pred_region
      %19 = vsyncadd [#allocation4], 0
      %s20 = sshll.u32 %s0, 4
      %s21 = int_to_ptr.hbm [resolvable:$true] %s20
      %s22 = sshll.u32 [#allocation3], 4
      %s23 = int_to_ptr.vmem [resolvable:$true] %s22
      %28 = dma.hbm_to_vmem [thread:$0]  %s21, 1024, %s23, [#allocation4], 128, 128, 8
    $region5: #{tpu_custom_call.1} parent=1 // pred_fallthru
      _
    // Predicated region
    $region6: #{tpu_custom_call.1} parent=1 // pred_check
      _
    $region7: #{tpu_custom_call.1} parent=1 // pred_check_branch
      %30 = sbr.rel (0) target = $region9
    $region8: #{tpu_custom_call.1} parent=1 // pred_region
      _
    $region9: #{tpu_custom_call.1} parent=1 // pred_fallthru
      _
    // Predicated region
    $region10: #{tpu_custom_call.1} parent=1 // pred_check
      _
    $region11: #{tpu_custom_call.1} parent=1 // pred_check_branch
      %32 = sbr.rel (0) target = $region13
    $region12: #{tpu_custom_call.1} parent=1 // pred_region
      _
    $region13: #{tpu_custom_call.1} parent=1 // pred_fallthru
      _
    // Predicated region
    $region14: #{tpu_custom_call.1} parent=1 // pred_check
      _
    $region15: #{tpu_custom_call.1} parent=1 // pred_check_branch
      %34 = sbr.rel (0) target = $region17
    $region16: #{tpu_custom_call.1} parent=1 // pred_region
      _
    $region17: #{tpu_custom_call.1} parent=1 // pred_fallthru
      _
    // Predicated region
    $region18: #{tpu_custom_call.1} parent=1 // pred_check
      _
    $region19: #{tpu_custom_call.1} parent=1 // pred_check_branch
      %36 = sbr.rel (0) target = $region21
    $region20: #{tpu_custom_call.1} parent=1 // pred_region
      _
    $region21: #{tpu_custom_call.1} parent=1 // pred_fallthru
      _
    // Predicated region
    $region22: #{tpu_custom_call.1} parent=1 // pred_check
      _
    $region23: #{tpu_custom_call.1} parent=1 // pred_check_branch
      %38 = sbr.rel (0) target = $region25
    $region24: #{tpu_custom_call.1} parent=1 // pred_region
      _
    $region25: #{tpu_custom_call.1} parent=1 // pred_fallthru
      _
    // Predicated region
    $region26: #{tpu_custom_call.1} parent=1 // pred_check
      _
    $region27: #{tpu_custom_call.1} parent=1 // pred_check_branch
      %40 = sbr.rel (0) target = $region29
    $region28: #{tpu_custom_call.1} parent=1 // pred_region
      _
    $region29: #{tpu_custom_call.1} parent=1 // pred_fallthru
      _
    // Predicated region
    $region30: #{tpu_custom_call.1} parent=1 // pred_check
      _
    $region31: #{tpu_custom_call.1} parent=1 // pred_check_branch
      %42 = sbr.rel (0) target = $region33
    $region32: #{tpu_custom_call.1} parent=1 // pred_region
      %44 = dma.done [#allocation4], 1024
    $region33: #{tpu_custom_call.1} parent=1 // pred_fallthru
      _
    %v45 = vld [vmem:[#allocation3] sm:$0xff]
    %v46 = vld [vmem:[#allocation3 + $0x8] sm:$0xff]
    %v47 = vld [vmem:[#allocation3 + $0x10] sm:$0xff]
    %v48 = vld [vmem:[#allocation3 + $0x18] sm:$0xff]
    %v49 = vld [vmem:[#allocation3 + $0x20] sm:$0xff]
    %v50 = vld [vmem:[#allocation3 + $0x28] sm:$0xff]
    %v51 = vld [vmem:[#allocation3 + $0x30] sm:$0xff]
    %v52 = vld [vmem:[#allocation3 + $0x38] sm:$0xff]
    %v53 = vld [vmem:[%s1] sm:$0xff]
    %v54 = vld [vmem:[%s1 + $0x8] sm:$0xff]
    %v55 = vld [vmem:[%s1 + $0x10] sm:$0xff]
    %v56 = vld [vmem:[%s1 + $0x18] sm:$0xff]
    %v57 = vld [vmem:[%s2] sm:$0xff]
    %v58 = vld [vmem:[%s2 + $0x8] sm:$0xff]
    %v59 = vld [vmem:[%s2 + $0x10] sm:$0xff]
    %v60 = vld [vmem:[%s2 + $0x18] sm:$0xff]
    %62 = vset.pattern.permute.xlu0 0
    %63 = vperm.xlu0 %62, %v57
    %v64 = vpop.permute.xlu0 %63
    %67 = vset.pattern.permute.xlu0 0
    %68 = vperm.xlu0 %67, %v58
    %v69 = vpop.permute.xlu0 %68
    %72 = vset.pattern.permute.xlu0 0
    %73 = vperm.xlu0 %72, %v59
    %v74 = vpop.permute.xlu0 %73
    %77 = vset.pattern.permute.xlu0 0
    %78 = vperm.xlu0 %77, %v60
    %v79 = vpop.permute.xlu0 %78
    %vm81 = vcmask 523264
    %v83 = vsel %vm81, %v53, 0
    %v86 = vsel %vm81, %v54, 0
    %v89 = vsel %vm81, %v55, 0
    %v92 = vsel %vm81, %v56, 0
    %v95 = vsel %vm81, %v45, 0
    %v98 = vsel %vm81, %v46, 0
    %v101 = vsel %vm81, %v47, 0
    %v104 = vsel %vm81, %v48, 0
    %v107 = vsel %vm81, %v49, 0
    %v110 = vsel %vm81, %v50, 0
    %v113 = vsel %vm81, %v51, 0
    %v116 = vsel %vm81, %v52, 0
    %118 = vmatpush.xpose.msra.mxu0 0.0
    %119 = vmatpush.xpose.msra.mxu0 0.0
    %120 = vmatpush.xpose.msra.mxu0 0.0
    %121 = vmatpush.xpose.msra.mxu0 0.0
    %122 = vmatpush.xpose.msra.mxu0 0.0
    %123 = vmatpush.xpose.msra.mxu0 0.0
    %124 = vmatpush.xpose.msra.mxu0 0.0
    %125 = vmatpush.xpose.msra.mxu0 0.0
    %126 = vmatpush.xpose.msra.mxu0 %v116
    %127 = vmatpush.xpose.msra.mxu0 %v113
    %128 = vmatpush.xpose.msra.mxu0 %v110
    %129 = vmatpush.xpose.msra.mxu0 %v107
    %130 = vmatpush.xpose.msra.mxu0 %v104
    %131 = vmatpush.xpose.msra.mxu0 %v101
    %132 = vmatpush.xpose.msra.mxu0 %v98
    %133 = vmatpush.xpose.msra.mxu0 %v95
    %134 = vmatmul.f32.gmra.mxu0 %v83
    %v135 = vpop.f32.mrf.mxu0
    %v136 = vadd.f32 %v64, %v135
    %137 = vmatmul.f32.gmra.mxu0 %v86
    %v138 = vpop.f32.mrf.mxu0
    %v139 = vadd.f32 %v69, %v138
    %140 = vmatmul.f32.gmra.mxu0 %v89
    %v141 = vpop.f32.mrf.mxu0
    %v142 = vadd.f32 %v74, %v141
    %143 = vmatmul.f32.gmra.mxu0 %v92
    %v144 = vpop.f32.mrf.mxu0
    %v145 = vadd.f32 %v79, %v144
    %146 = vdwg.mxu0
    %v147 = vmax.f32 %v136, 0.0
    %v148 = vmax.f32 %v139, 0.0
    %v149 = vmax.f32 %v142, 0.0
    %v150 = vmax.f32 %v145, 0.0
    %v151 = vld [vmem:[%s3] sm:$0xff]
    %v152 = vld [vmem:[%s3 + $0x8] sm:$0xff]
    %v153 = vld [vmem:[%s4] sm:$0xff]
    %v154 = vld [vmem:[%s4 + $0x8] sm:$0xff]
    %156 = vset.pattern.permute.xlu0 0
    %157 = vperm.xlu0 %156, %v153
    %v158 = vpop.permute.xlu0 %157
    %161 = vset.pattern.permute.xlu0 0
    %162 = vperm.xlu0 %161, %v154
    %v163 = vpop.permute.xlu0 %162
    %vm165 = vcmask 261120
    %v167 = vsel %vm165, %v151, 0
    %v170 = vsel %vm165, %v152, 0
    %172 = vmatpush.msra.mxu0 0.0
    %173 = vmatpush.msra.mxu0 0.0
    %174 = vmatpush.msra.mxu0 0.0
    %175 = vmatpush.msra.mxu0 0.0
    %176 = vmatpush.msra.mxu0 0.0
    %177 = vmatpush.msra.mxu0 0.0
    %178 = vmatpush.msra.mxu0 0.0
    %179 = vmatpush.msra.mxu0 0.0
    %180 = vmatpush.msra.mxu0 0.0
    %181 = vmatpush.msra.mxu0 0.0
    %182 = vmatpush.msra.mxu0 0.0
    %183 = vmatpush.msra.mxu0 0.0
    %184 = vmatpush.msra.mxu0 %v150
    %185 = vmatpush.msra.mxu0 %v149
    %186 = vmatpush.msra.mxu0 %v148
    %187 = vmatpush.msra.mxu0 %v147
    %188 = vmatmul.f32.gmra.mxu0 %v167
    %v189 = vpop.f32.mrf.mxu0
    %v190 = vadd.f32 %v158, %v189
    %191 = vmatmul.f32.gmra.mxu0 %v170
    %v192 = vpop.f32.mrf.mxu0
    %v193 = vadd.f32 %v163, %v192
    %194 = vdwg.mxu0
    %v195 = vmax.f32 %v190, 0.0
    %v196 = vmax.f32 %v193, 0.0
    %v197 = vld [vmem:[%s5] sm:$0x1]
    %v198 = vld [vmem:[#allocation2] sm:$0x1]
    %200 = vset.pattern.permute.xlu0 0
    %201 = vperm.xlu0 %200, %v198
    %v202 = vpop.permute.xlu0 %201
    %v204 = vperm.slane %v202, 0
    %vm205 = vcmask 130048
    %v207 = vsel %vm205, %v197, 0
    %209 = vmatpush.msra.mxu0 0.0
    %210 = vmatpush.msra.mxu0 0.0
    %211 = vmatpush.msra.mxu0 0.0
    %212 = vmatpush.msra.mxu0 0.0
    %213 = vmatpush.msra.mxu0 0.0
    %214 = vmatpush.msra.mxu0 0.0
    %215 = vmatpush.msra.mxu0 0.0
    %216 = vmatpush.msra.mxu0 0.0
    %217 = vmatpush.msra.mxu0 0.0
    %218 = vmatpush.msra.mxu0 0.0
    %219 = vmatpush.msra.mxu0 0.0
    %220 = vmatpush.msra.mxu0 0.0
    %221 = vmatpush.msra.mxu0 0.0
    %222 = vmatpush.msra.mxu0 0.0
    %223 = vmatpush.msra.mxu0 %v196
    %224 = vmatpush.msra.mxu0 %v195
    %225 = vmatmul.f32.gmra.mxu0 %v207
    %v226 = vpop.f32.mrf.mxu0
    %v227 = vadd.f32 %v204, %v226
    %228 = vdwg.mxu0
    %v229 = vxor.u32 %v227, 2147483648
    %v230 = vmul.f32 %v229, 1.442695
    %v231 = vpow.pop %v230
    %v232 = vadd.f32 %v231, 1.0
    %v233 = vrcp.pop %v232
    %v234 = vmul.f32 %v232, %v233
    %v235 = vsub.f32 1.0, %v234
    %v236 = vmul.f32 %v233, %v235
    %v237 = vadd.f32 %v233, %v236
    %vm238 = vweird.f32 %v232
    %vm239 = vweird.f32 %v233
    %vm240 = vmor %vm238, %vm239
    %v241 = vsel %vm240, %v233, %v237
    %v242 = vand.u32 2147483647, %v232
    %vm243 = vcmp.eq.f32.partialorder %v242, 8.507059e+37
    %v244 = vand.u32 %v232, 2147483648
    %v245 = vor.u32 1.1754944e-38, %v244
    %v246 = vsel %vm243, %v245, %v241
    %v247 = vmul.f32 1.0, %v246
    %vm248 = vcmask 516096
    %249 = vst.msk [vmem:[#allocation6] sm:$0x1] %vm248, %v247
    // Predicated region
    $region34: #{tpu_custom_call.1} parent=1 // pred_check
      _
    $region35: #{tpu_custom_call.1} parent=1 // pred_check_branch
      %251 = sbr.rel (0) target = $region37
    $region36: #{tpu_custom_call.1} parent=1 // pred_region
      %253 = vsyncadd [#allocation5], 0
      %s255 = sshll.u32 [#allocation6], 4
      %s256 = int_to_ptr.vmem [resolvable:$true] %s255
      %s257 = sshll.u32 %s7, 4
      %s258 = int_to_ptr.hbm [resolvable:$true] %s257
      %260 = dma.vmem_to_hbm [thread:$0]  %s256, 16, %s258, [#allocation5]
    $region37: #{tpu_custom_call.1} parent=1 // pred_fallthru
      _
    // Predicated region
    $region38: #{tpu_custom_call.1} parent=1 // pred_check
      _
    $region39: #{tpu_custom_call.1} parent=1 // pred_check_branch
      %262 = sbr.rel (0) target = $region41
    $region40: #{tpu_custom_call.1} parent=1 // pred_region
      %264 = dma.done [#allocation5], 16
    $region41: #{tpu_custom_call.1} parent=1 // pred_fallthru
      _
    %265 = vsyncpa [#allocation4], 1
    %266 = vsyncpa [#allocation5], 1

</llo_original>
